<compile_context>
chip_gen: v5e
topology: v5e:2x2
jax: 0.10.0
libtpu: 0.0.40
codegen_flags: <defaults>
</compile_context>

<pallas_src>
import jax
import jax.numpy as jnp
from jax.experimental import pallas as pl
from jax.experimental.pallas import tpu as pltpu


def _cdiv(a, b):
    return -(-a // b)


def _round_up(x, m):
    return _cdiv(x, m) * m


def _sublanes(itemsize):
    return 8 if itemsize >= 4 else (16 if itemsize == 2 else 32)


def _choose_tk(b_rows, m, itemsize, target_bytes=4 * 1024 * 1024):
    """TK sized for ~target_bytes per pipelined step (amortizes the ~0.35us grid-step overhead)."""
    tk = max(128, (target_bytes // max(1, b_rows * itemsize)) // 128 * 128)
    if tk >= m:
        return m  # single full-width tile; any width is legal when it equals the full dim
    return tk


def _buf_bytes(rows, cols, itemsize, nbuf=2):
    return nbuf * _round_up(rows, _sublanes(itemsize)) * _round_up(max(cols, 1), 128) * itemsize


def _vmem_limit_bytes(n, c, logits_itemsize, b, tk, r_itemsize):
    total = (_buf_bytes(b, tk, r_itemsize)          # pipelined R tile (double-buffered)
             + _buf_bytes(n, c, logits_itemsize)    # grid-invariant logits block
             + _buf_bytes(n, 1, 4)                  # targets (int32)
             + _buf_bytes(b, b, 4)                  # resident f32 Gram accumulator block
             + _buf_bytes(1, 1, 4))                 # CE block
    total += 4 * 1024 * 1024                        # compiler scratch headroom
    # computed limit (not a flat 32 MiB): safe on v5e/v6e (128 MiB phys) and v7x (64 MiB phys)
    return int(min(max(total, 16 * 1024 * 1024), 48 * 1024 * 1024))


def _make_kernel(nk, tk, rem, half):
    """nk: total M-tiles, tk: tile width, rem: valid cols in last tile (0 = full), half: tiles per split."""

    def kernel(logits_ref, targets_ref, r_ref, ce_ref, gram_ref):
        s = pl.program_id(0)   # partial-Gram split index ("parallel": one per v7x TensorCore)
        k = pl.program_id(1)   # position within this split's slice of the M reduction ("arbitrary")
        g = s * half + k       # global M-tile index

        @pl.when(k == 0)
        def _init():
            gram_ref[...] = jnp.zeros_like(gram_ref)
            ce_ref[...] = jnp.zeros((1, 1, 1), jnp.float32)

        # ---- cross-entropy (mean over N), computed exactly once, by split 0 ----
        @pl.when((s == 0) & (k == 0))
        def _cross_entropy():
            logits = logits_ref[...].astype(jnp.float32)        # native dtype in HBM, f32 here
            tgt = targets_ref[...]                               # [N, 1] int32
            n_rows, n_cols = logits.shape
            row_max = jnp.max(logits, axis=-1, keepdims=True)
            lse = row_max + jnp.log(jnp.sum(jnp.exp(logits - row_max), axis=-1, keepdims=True))
            col = jax.lax.broadcasted_iota(jnp.int32, (n_rows, n_cols), 1)
            tgt_logit = jnp.sum(logits * (col == tgt).astype(jnp.float32), axis=-1, keepdims=True)
            ce_ref[...] = (jnp.sum(lse - tgt_logit) / n_rows).reshape(1, 1, 1)
            # TODO(synk): for very large N*C the CE block should be tiled over N on its own axis.

        # ---- partial-Gram accumulation: R_tile @ R_tile^T via last-dim contraction (no transpose) ----
        @pl.when(g < nk)   # split 1 may have one dummy step when nk is odd; skip it
        def _accumulate():
            r = r_ref[...]                                       # [B, TK], native dtype
            if rem:  # static: M is not a multiple of TK -> mask the ragged last tile in-kernel
                col = jax.lax.broadcasted_iota(jnp.int32, r.shape, 1)
                limit = jnp.where(g == nk - 1, rem, tk)
                r = jnp.where(col < limit, r, jnp.zeros_like(r))
            gram_ref[...] += jax.lax.dot_general(
                r, r,
                dimension_numbers=(((1,), (1,)), ((), ())),
                preferred_element_type=jnp.float32,
            )[None]

    return kernel


def elastic_net_loss(outputs, targets, representations,
                     nuclear_strength, frobenius_strength, *, tk=None):
    """Reproduces ElasticNetLoss.forward (base_loss='CE')."""
    n, c = outputs.shape
    b = representations.shape[0]

    # representations.view(B, -1) -- native dtype, NO padding (saves a full HBM pass over R)
    r = representations.reshape(b, -1)
    m = r.shape[1]
    r_itemsize = jnp.dtype(r.dtype).itemsize

    if tk is None:
        tk = _choose_tk(b, m, r_itemsize)
    if tk >= m:
        tk = m
    else:
        assert tk % 128 == 0, "tk must be a multiple of 128 (or >= M)"

    nk = _cdiv(m, tk)          # total M-tiles
    rem = m % tk               # valid columns in the last (possibly ragged) tile; 0 = full
    nsplit = 2 if nk >= 2 else 1   # 2-way partial-Gram split: both v7x TCs; sequential on v5e/v6e
    half = _cdiv(nk, nsplit)
    grid = (nsplit, half)

    vmem_limit = _vmem_limit_bytes(n, c, jnp.dtype(outputs.dtype).itemsize, b, tk, r_itemsize)

    kernel = _make_kernel(nk, tk, rem, half)

    ce, gram_parts = pl.pallas_call(
        kernel,
        out_shape=(
            jax.ShapeDtypeStruct((nsplit, 1, 1), jnp.float32),   # CE (only split 0 is meaningful)
            jax.ShapeDtypeStruct((nsplit, b, b), jnp.float32),   # partial Grams, summed in wrapper
        ),
        grid=grid,
        in_specs=[
            pl.BlockSpec((n, c), lambda s, k: (0, 0)),           # logits, resident, native dtype
            pl.BlockSpec((n, 1), lambda s, k: (0, 0)),           # targets, resident
            pl.BlockSpec(                                        # R, tiled over M, pipelined DMA
                (b, tk),
                lambda s, k, half=half, nk=nk: (0, jnp.minimum(s * half + k, nk - 1))),
        ],
        out_specs=(
            pl.BlockSpec((1, 1, 1), lambda s, k: (s, 0, 0)),
            pl.BlockSpec((1, b, b), lambda s, k: (s, 0, 0)),     # resident per-split accumulator
        ),
        compiler_params=pltpu.CompilerParams(
            dimension_semantics=("parallel", "arbitrary"),
            vmem_limit_bytes=vmem_limit,
        ),
    )(outputs, targets.astype(jnp.int32).reshape(n, 1), r)

    ce = ce[0, 0, 0]
    gram = jnp.sum(gram_parts, axis=0)                           # [B, B] = R @ R^T

    # Frobenius norm for free from the Gram diagonal: ||R||_F = sqrt(trace(R R^T))
    avg_frobenius_norm = jnp.sqrt(jnp.trace(gram)) / b

    # singular values of R are sqrt of eigenvalues of R R^T
    # TODO(synk): no Pallas SVD primitive; eigvalsh on the tiny [B, B] Gram in plain JAX.
    #             Note this squares the condition number vs torch.svd for ill-conditioned R.
    eigs = jnp.linalg.eigvalsh(gram)
    s = jnp.sqrt(jnp.clip(eigs, 0.0, None))
    avg_nuclear_norm = jnp.sum(s) / b

    total_loss = (ce
                  + nuclear_strength * avg_nuclear_norm
                  + frobenius_strength * avg_frobenius_norm)
    return total_loss, avg_nuclear_norm, avg_frobenius_norm


if __name__ == "__main__":
    key = jax.random.PRNGKey(0)
    k1, k2, k3 = jax.random.split(key, 3)

    # small deterministic inputs; M = 3*10*10 = 300 exercises the ragged last tile and
    # the uneven 2-way split (nk=3 tiles of 128 -> split 0 gets 2 tiles, split 1 gets 1 + dummy)
    N, C = 8, 16
    B, CH, H, W = 8, 3, 10, 10

    outputs = jax.random.normal(k1, (N, C), dtype=jnp.float32)
    targets = jax.random.randint(k2, (N,), 0, C, dtype=jnp.int32)
    representations = jax.random.normal(k3, (B, CH, H, W), dtype=jnp.float32)

    nuclear_strength = 0.1
    frobenius_strength = 0.01

    # tk=128 so the demo exercises the tiled/pipelined reduction + masking + split paths
    total, avg_nuc, avg_fro = elastic_net_loss(
        outputs, targets, representations,
        nuclear_strength, frobenius_strength, tk=128)
    jax.block_until_ready(total)

    # pure-JAX reference (same Gram->eig route for the nuclear norm)
    r_ref = representations.reshape(B, -1).astype(jnp.float32)
    logits = outputs.astype(jnp.float32)
    lse = jax.nn.logsumexp(logits, axis=-1)
    ce_ref = jnp.mean(lse - jnp.take_along_axis(logits, targets[:, None], axis=-1)[:, 0])
    gram_ref = r_ref @ r_ref.T
    fro_ref = jnp.sqrt(jnp.trace(gram_ref)) / B
    nuc_ref = jnp.sum(jnp.sqrt(jnp.clip(jnp.linalg.eigvalsh(gram_ref), 0.0, None))) / B
    total_ref = ce_ref + nuclear_strength * nuc_ref + frobenius_strength * fro_ref
    assert jnp.allclose(total, total_ref, rtol=2e-3, atol=2e-3), (float(total), float(total_ref))

    # mirrors the module's debug print
    print(f"Debugging! avg nuclear norm: {float(avg_nuc)}, "
          f"avg frobenius norm: {float(avg_fro)}")
    print("KERNEL_OK")
</pallas_src>

<mosaic_0001>
module attributes {stable_mosaic.version = 11 : i64} {
  func.func @kernel(%arg0: i32, %arg1: i32, %arg2: memref<8x16xf32, #tpu.memory_space<vmem>>, %arg3: memref<8x1xi32, #tpu.memory_space<vmem>>, %arg4: memref<8x128xf32, #tpu.memory_space<vmem>>, %arg5: memref<1x1x1xf32, #tpu.memory_space<vmem>>, %arg6: memref<1x8x8xf32, #tpu.memory_space<vmem>>) attributes {dimension_semantics = [#tpu.dimension_semantics<parallel>, #tpu.dimension_semantics<arbitrary>], iteration_bounds = array<i64: 2, 2>, scalar_prefetch = 0 : i64, scratch_operands = 0 : i64, tpu.core_type = #tpu.core_type<tc>, window_params = [{pipeline_mode = #tpu.pipeline_mode<synchronous>, transform_indices = @transform_0, window_bounds = array<i64: 8, 16>}, {pipeline_mode = #tpu.pipeline_mode<synchronous>, transform_indices = @transform_1, window_bounds = array<i64: 8, 1>}, {transform_indices = @transform_2, window_bounds = array<i64: 8, 128>}, {transform_indices = @transform_3, window_bounds = array<i64: 1, 1, 1>}, {transform_indices = @transform_4, window_bounds = array<i64: 1, 8, 8>}]} {
    %c2_i32 = arith.constant 2 : i32
    %0 = arith.muli %arg0, %c2_i32 : i32
    %1 = arith.addi %0, %arg1 : i32
    %c0_i32 = arith.constant 0 : i32
    %2 = arith.cmpi eq, %arg1, %c0_i32 : i32
    %3 = arith.extui %2 : i1 to i32
    %c0_i32_0 = arith.constant 0 : i32
    %4 = arith.cmpi ne, %3, %c0_i32_0 : i32
    scf.if %4 {
      %cst = arith.constant 0.000000e+00 : f32
      %13 = vector.broadcast %cst : f32 to vector<1x8x8xf32>
      %c0 = arith.constant 0 : index
      %c0_5 = arith.constant 0 : index
      %c0_6 = arith.constant 0 : index
      %14 = vector.load %arg6[%c0, %c0_5, %c0_6] : memref<1x8x8xf32, #tpu.memory_space<vmem>>, vector<1x8x8xf32>
      tpu.vector_store %arg6[%c0, %c0_5, %c0_6], %13 {strides = array<i32>} : memref<1x8x8xf32, #tpu.memory_space<vmem>>, vector<1x8x8xf32>,
      %cst_7 = arith.constant 0.000000e+00 : f32
      %15 = vector.broadcast %cst_7 : f32 to vector<1x1x1xf32>
      %c0_8 = arith.constant 0 : index
      %c0_9 = arith.constant 0 : index
      %c0_10 = arith.constant 0 : index
      %16 = vector.load %arg5[%c0_8, %c0_9, %c0_10] : memref<1x1x1xf32, #tpu.memory_space<vmem>>, vector<1x1x1xf32>
      tpu.vector_store %arg5[%c0_8, %c0_9, %c0_10], %15 {strides = array<i32>} : memref<1x1x1xf32, #tpu.memory_space<vmem>>, vector<1x1x1xf32>,
    } else {
    }
    %c0_i32_1 = arith.constant 0 : i32
    %5 = arith.cmpi eq, %arg0, %c0_i32_1 : i32
    %c0_i32_2 = arith.constant 0 : i32
    %6 = arith.cmpi eq, %arg1, %c0_i32_2 : i32
    %7 = arith.andi %5, %6 : i1
    %8 = arith.extui %7 : i1 to i32
    %c0_i32_3 = arith.constant 0 : i32
    %9 = arith.cmpi ne, %8, %c0_i32_3 : i32
    scf.if %9 {
      %c0 = arith.constant 0 : index
      %c0_5 = arith.constant 0 : index
      %13 = vector.load %arg2[%c0, %c0_5] : memref<8x16xf32, #tpu.memory_space<vmem>>, vector<8x16xf32>
      %c0_6 = arith.constant 0 : index
      %c0_7 = arith.constant 0 : index
      %14 = vector.load %arg3[%c0_6, %c0_7] : memref<8x1xi32, #tpu.memory_space<vmem>>, vector<8x1xi32>
      %cst = arith.constant dense<0xFF800000> : vector<8xf32>
      %15 = vector.multi_reduction <maximumf>, %13, %cst [1] : vector<8x16xf32> to vector<8xf32>
      %16 = vector.shape_cast %15 : vector<8xf32> to vector<8x1xf32>
      %17 = vector.broadcast %16 : vector<8x1xf32> to vector<8x16xf32>
      %18 = arith.subf %13, %17 : vector<8x16xf32>
      %19 = math.exp %18 : vector<8x16xf32>
      %cst_8 = arith.constant dense<0.000000e+00> : vector<8xf32>
      %20 = vector.multi_reduction <add>, %19, %cst_8 [1] : vector<8x16xf32> to vector<8xf32>
      %21 = vector.shape_cast %20 : vector<8xf32> to vector<8x1xf32>
      %22 = math.log %21 : vector<8x1xf32>
      %23 = arith.addf %16, %22 : vector<8x1xf32>
      %24 = tpu.iota {dimensions = array<i32: 1>} : vector<8x16xi32>
      %25 = vector.broadcast %14 : vector<8x1xi32> to vector<8x16xi32>
      %26 = arith.cmpi eq, %24, %25 : vector<8x16xi32>
      %27 = arith.extui %26 : vector<8x16xi1> to vector<8x16xi32>
      %28 = arith.sitofp %27 : vector<8x16xi32> to vector<8x16xf32>
      %29 = arith.mulf %13, %28 : vector<8x16xf32>
      %cst_9 = arith.constant dense<0.000000e+00> : vector<8xf32>
      %30 = vector.multi_reduction <add>, %29, %cst_9 [1] : vector<8x16xf32> to vector<8xf32>
      %31 = vector.shape_cast %30 : vector<8xf32> to vector<8x1xf32>
      %32 = arith.subf %23, %31 : vector<8x1xf32>
      %33 = vector.shape_cast %32 : vector<8x1xf32> to vector<1x8x1xf32>
      %cst_10 = arith.constant dense<0.000000e+00> : vector<1xf32>
      %34 = vector.multi_reduction <add>, %33, %cst_10 [1, 2] : vector<1x8x1xf32> to vector<1xf32>
      %35 = vector.shape_cast %34 : vector<1xf32> to vector<1x1x1xf32>
      %36 = vector.extract %35[0, 0, 0] : f32 from vector<1x1x1xf32>
      %cst_11 = arith.constant 8.000000e+00 : f32
      %37 = arith.divf %36, %cst_11 : f32
      %38 = vector.broadcast %37 : f32 to vector<1x1x1xf32>
      %c0_12 = arith.constant 0 : index
      %c0_13 = arith.constant 0 : index
      %c0_14 = arith.constant 0 : index
      %39 = vector.load %arg5[%c0_12, %c0_13, %c0_14] : memref<1x1x1xf32, #tpu.memory_space<vmem>>, vector<1x1x1xf32>
      tpu.vector_store %arg5[%c0_12, %c0_13, %c0_14], %38 {strides = array<i32>} : memref<1x1x1xf32, #tpu.memory_space<vmem>>, vector<1x1x1xf32>,
    } else {
    }
    %c3_i32 = arith.constant 3 : i32
    %10 = arith.cmpi slt, %1, %c3_i32 : i32
    %11 = arith.extui %10 : i1 to i32
    %c0_i32_4 = arith.constant 0 : i32
    %12 = arith.cmpi ne, %11, %c0_i32_4 : i32
    scf.if %12 {
      %c0 = arith.constant 0 : index
      %c0_5 = arith.constant 0 : index
      %13 = vector.load %arg4[%c0, %c0_5] : memref<8x128xf32, #tpu.memory_space<vmem>>, vector<8x128xf32>
      %14 = tpu.iota {dimensions = array<i32: 1>} : vector<8x128xi32>
      %c2_i32_6 = arith.constant 2 : i32
      %15 = arith.cmpi eq, %1, %c2_i32_6 : i32
      %c44_i32 = arith.constant 44 : i32
      %c128_i32 = arith.constant 128 : i32
      %16 = arith.select %15, %c44_i32, %c128_i32 : i32
      %17 = vector.broadcast %16 : i32 to vector<8x128xi32>
      %18 = arith.cmpi slt, %14, %17 : vector<8x128xi32>
      %cst = arith.constant 0.000000e+00 : f32
      %19 = vector.broadcast %cst : f32 to vector<8x128xf32>
      %20 = arith.select %18, %13, %19 : vector<8x128xi1>, vector<8x128xf32>
      %c0_7 = arith.constant 0 : index
      %c0_8 = arith.constant 0 : index
      %c0_9 = arith.constant 0 : index
      %21 = vector.load %arg6[%c0_7, %c0_8, %c0_9] : memref<1x8x8xf32, #tpu.memory_space<vmem>>, vector<1x8x8xf32>
      %cst_10 = arith.constant dense<0.000000e+00> : vector<8x8xf32>
      %22 = tpu.matmul %20, %20, %cst_10 {dimension_numbers = #tpu.dot_dimension_numbers<[1], [1], [0], [0], [0, 0, 1, 0], [], []>} : vector<8x128xf32>, vector<8x128xf32>, vector<8x8xf32> -> vector<8x8xf32>
      %23 = vector.shape_cast %22 : vector<8x8xf32> to vector<1x8x8xf32>
      %24 = arith.addf %21, %23 : vector<1x8x8xf32>
      %c0_11 = arith.constant 0 : index
      %c0_12 = arith.constant 0 : index
      %c0_13 = arith.constant 0 : index
      %25 = vector.load %arg6[%c0_11, %c0_12, %c0_13] : memref<1x8x8xf32, #tpu.memory_space<vmem>>, vector<1x8x8xf32>
      tpu.vector_store %arg6[%c0_11, %c0_12, %c0_13], %24 {strides = array<i32>} : memref<1x8x8xf32, #tpu.memory_space<vmem>>, vector<1x8x8xf32>,
    } else {
    }
    return
  }
  func.func @transform_0(%arg0: i32, %arg1: i32) -> (i32, i32) {
    %c0_i32 = arith.constant 0 : i32
    %c0_i32_0 = arith.constant 0 : i32
    %c0_i32_1 = arith.constant 0 : i32
    return %c0_i32, %c0_i32_0 : i32, i32
  }
  func.func @transform_1(%arg0: i32, %arg1: i32) -> (i32, i32) {
    %c0_i32 = arith.constant 0 : i32
    %c0_i32_0 = arith.constant 0 : i32
    %c0_i32_1 = arith.constant 0 : i32
    return %c0_i32, %c0_i32_0 : i32, i32
  }
  func.func @transform_2(%arg0: i32, %arg1: i32) -> (i32, i32) {
    %c2_i32 = arith.constant 2 : i32
    %0 = arith.muli %arg0, %c2_i32 : i32
    %1 = arith.addi %0, %arg1 : i32
    %c2_i32_0 = arith.constant 2 : i32
    %2 = arith.minsi %1, %c2_i32_0 : i32
    %c0_i32 = arith.constant 0 : i32
    %c0_i32_1 = arith.constant 0 : i32
    return %c0_i32, %2 : i32, i32
  }
  func.func @transform_3(%arg0: i32, %arg1: i32) -> (i32, i32, i32) {
    %c0_i32 = arith.constant 0 : i32
    %c0_i32_0 = arith.constant 0 : i32
    %c0_i32_1 = arith.constant 0 : i32
    return %arg0, %c0_i32, %c0_i32_0 : i32, i32, i32
  }
  func.func @transform_4(%arg0: i32, %arg1: i32) -> (i32, i32, i32) {
    %c0_i32 = arith.constant 0 : i32
    %c0_i32_0 = arith.constant 0 : i32
    %c0_i32_1 = arith.constant 0 : i32
    return %arg0, %c0_i32, %c0_i32_0 : i32, i32, i32
  }
}

</mosaic_0001>

<llo_original>
// kernel: tpu_custom_call.1
$region0: #{tpu_custom_call.1}
  #allocation0 [shape = 'u32[]', space=smem, size = 0x4, offset = 0x4, fixed_abs, tag = 'smem constant byte address 0x4 - core index']
  #allocation1 [shape = 'u32[72,128]{1,0:T(1,128)}', space=vmem, size = 0x9000, scoped, tag = 'internal scratch']
  %s0 = inlined_call_operand.vmem [shape: f32[8,16], index: 0, kind: input, shape index: {}]
  %s1 = inlined_call_operand.vmem [shape: s32[8,1], index: 1, kind: input, shape index: {}]
  %s2 = inlined_call_operand.hbm [shape: f32[8,300], index: 2, kind: input, shape index: {}]
  %s3 = inlined_call_operand.vmem [shape: f32[2,1,1], index: 3, kind: output, shape index: {0}]
  %s4 = inlined_call_operand.hbm [shape: f32[2,8,8], index: 4, kind: output, shape index: {1}]
  %5 = xla_tuple %s3, %s4
  %s6 = sld [smem:[#allocation0]]
  $region69: #{tpu_custom_call.1} parent=0
    _
  %s8 = ssub.s32 1, %s6
  %s9 = scalar_select 0, %s8, %s6
  $region1: #{tpu_custom_call.1} parent=0
    #allocation2 [shape = 'u8[8192]{0}', space=vmem, size = 0x2000, scoped, tag = 'input window, operand 2']
    #allocation3 [shape = 's32[2]{0}', space=sflag, size = 0x8, scoped, tag = 'scoped memory for tpu_custom_call.1']
    #allocation4 [shape = 's32[2]{0}', space=sflag, size = 0x8, scoped, tag = 'scoped memory for tpu_custom_call.1']
    #allocation5 [shape = 'u8[8192]{0}', space=vmem, size = 0x2000, scoped, tag = 'output window, operand 1']
    %10 = vsyncpa [#allocation3], 0
    %s11 = scalar_lea.sflag [#allocation3], 1
    %12 = vsyncpa %s11, 0
    %13 = vsyncpa [#allocation4], 0
    %s14 = scalar_lea.sflag [#allocation4], 1
    %15 = vsyncpa %s14, 0
    loop: start=0, step=1, limit=6
    $region2: #{tpu_custom_call.1} parent=1 // loop_pre_header
      _
    $region3: #{tpu_custom_call.1} parent=1 // loop_header
      %s17 = sphi 0, %s21
      %p18 = scmp.ge.s32.totalorder %s17, 6
      %s24 = sphi 0, %s36
      %s25 = sphi 0, %s32
      %s26 = sphi 0, %s24
      %s27 = sphi 0, %s25
      %s28 = sphi 0, %s26
      %s29 = sphi 0, %s27
      %s37 = sphi 0, %s37
      %s39 = sphi 0, %s37
      %s40 = sphi 0, %s39
      %s54 = sphi 0, %s40
      %s58 = sphi 0, %s58
      %s60 = sphi 0, %s58
      %s61 = sphi 0, %s60
      %s75 = sphi 0, %s61
      %s89 = sphi 0, %s91
      %s92 = sphi 0, %s89
      %s93 = sphi 0, %s92
      %s109 = sphi 0, %s93
      %s115 = sphi 0, %s117
      %s118 = sphi 0, %s115
      %s119 = sphi 0, %s118
      %s135 = sphi 0, %s119
      %s141 = sphi 0, %s143
      %s144 = sphi 0, %s141
      %s145 = sphi 0, %s144
      %s161 = sphi 0, %s145
    $region4: #{tpu_custom_call.1} parent=1 // loop_header_branch
      %20 = sbr.rel (%p18) target = $region8
    $region5: #{tpu_custom_call.1} parent=1 // loop_body
      %s22 = ssub.s32 %s17, 1
      %s23 = ssub.s32 %s17, 2
      %s30 = sadd.s32 1, %s25
      %p31 = scmp.ge.s32.totalorder %s30, 2
      %s32 = scalar_select %p31, 0, %s30
      %s33 = sadd.s32 1, %s24
      %s34 = scalar_select %p31, %s33, %s24
      %p35 = scmp.ge.s32.totalorder %s34, 2
      %s36 = scalar_select %p35, 0, %s34
      %s38 = sadd.s32 %s37, 1
      %p41 = scmp.eq.s32.totalorder %s17, 3
      %p42 = scmp.ne.s32.totalorder %s37, %s39
      %p43 = scmp.eq.s32.totalorder %s17, 0
      %p44 = por %p42, %p43
      %p45 = scmp.ne.s32.totalorder %s37, %s39
      %p46 = scmp.eq.s32.totalorder %s22, 3
      %p47 = por %p45, %p46
      %p48 = scmp.ne.s32.totalorder %s39, %s40
      %p49 = scmp.eq.s32.totalorder %s22, 0
      %p50 = por %p48, %p49
      %p51 = scmp.ne.s32.totalorder %s39, %s40
      %p52 = scmp.eq.s32.totalorder %s23, 3
      %p53 = por %p51, %p52
      %p55 = scmp.ne.s32.totalorder %s40, %s54
      %p56 = scmp.eq.s32.totalorder %s23, 0
      %p57 = por %p55, %p56
      %s59 = sadd.s32 %s58, 1
      %p62 = scmp.eq.s32.totalorder %s17, 3
      %p63 = scmp.ne.s32.totalorder %s58, %s60
      %p64 = scmp.eq.s32.totalorder %s17, 0
      %p65 = por %p63, %p64
      %p66 = scmp.ne.s32.totalorder %s58, %s60
      %p67 = scmp.eq.s32.totalorder %s22, 3
      %p68 = por %p66, %p67
      %p69 = scmp.ne.s32.totalorder %s60, %s61
      %p70 = scmp.eq.s32.totalorder %s22, 0
      %p71 = por %p69, %p70
      %p72 = scmp.ne.s32.totalorder %s60, %s61
      %p73 = scmp.eq.s32.totalorder %s23, 3
      %p74 = por %p72, %p73
      %p76 = scmp.ne.s32.totalorder %s61, %s75
      %p77 = scmp.eq.s32.totalorder %s23, 0
      %p78 = por %p76, %p77
      %s79 = smul.u32 %s24, 2
      %s80 = sadd.s32 %s79, %s25
      %p81 = scmp.lt.s32.totalorder %s80, 2
      %s82 = scalar_select %p81, %s80, 2
      %s83 = smul.u32 %s36, 2
      %s84 = sadd.s32 %s83, %s32
      %p85 = scmp.lt.s32.totalorder %s84, 2
      %s86 = scalar_select %p85, %s84, 2
      %s87 = ssub.s32 %s82, %s86
      %p88 = scmp.eq.s32.totalorder %s87, 0
      %s90 = sadd.s32 %s89, 1
      %s91 = scalar_select %p88, %s89, %s90
      %p94 = pneg %p88
      %p95 = scmp.eq.s32.totalorder %s17, 3
      %p96 = por %p94, %p95
      %p97 = scmp.ne.s32.totalorder %s89, %s92
      %p98 = scmp.eq.s32.totalorder %s17, 0
      %p99 = por %p97, %p98
      %p100 = scmp.ne.s32.totalorder %s89, %s92
      %p101 = scmp.eq.s32.totalorder %s22, 3
      %p102 = por %p100, %p101
      %p103 = scmp.ne.s32.totalorder %s92, %s93
      %p104 = scmp.eq.s32.totalorder %s22, 0
      %p105 = por %p103, %p104
      %p106 = scmp.ne.s32.totalorder %s92, %s93
      %p107 = scmp.eq.s32.totalorder %s23, 3
      %p108 = por %p106, %p107
      %p110 = scmp.ne.s32.totalorder %s93, %s109
      %p111 = scmp.eq.s32.totalorder %s23, 0
      %p112 = por %p110, %p111
      %s113 = ssub.s32 %s24, %s36
      %p114 = scmp.eq.s32.totalorder %s113, 0
      %s116 = sadd.s32 %s115, 1
      %s117 = scalar_select %p114, %s115, %s116
      %p120 = pneg %p114
      %p121 = scmp.eq.s32.totalorder %s17, 3
      %p122 = por %p120, %p121
      %p123 = scmp.ne.s32.totalorder %s115, %s118
      %p124 = scmp.eq.s32.totalorder %s17, 0
      %p125 = por %p123, %p124
      %p126 = scmp.ne.s32.totalorder %s115, %s118
      %p127 = scmp.eq.s32.totalorder %s22, 3
      %p128 = por %p126, %p127
      %p129 = scmp.ne.s32.totalorder %s118, %s119
      %p130 = scmp.eq.s32.totalorder %s22, 0
      %p131 = por %p129, %p130
      %p132 = scmp.ne.s32.totalorder %s118, %s119
      %p133 = scmp.eq.s32.totalorder %s23, 3
      %p134 = por %p132, %p133
      %p136 = scmp.ne.s32.totalorder %s119, %s135
      %p137 = scmp.eq.s32.totalorder %s23, 0
      %p138 = por %p136, %p137
      %s139 = ssub.s32 %s24, %s36
      %p140 = scmp.eq.s32.totalorder %s139, 0
      %s142 = sadd.s32 %s141, 1
      %s143 = scalar_select %p140, %s141, %s142
      %p146 = pneg %p140
      %p147 = scmp.eq.s32.totalorder %s17, 3
      %p148 = por %p146, %p147
      %p149 = scmp.ne.s32.totalorder %s141, %s144
      %p150 = scmp.eq.s32.totalorder %s17, 0
      %p151 = por %p149, %p150
      %p152 = scmp.ne.s32.totalorder %s141, %s144
      %p153 = scmp.eq.s32.totalorder %s22, 3
      %p154 = por %p152, %p153
      %p155 = scmp.ne.s32.totalorder %s144, %s145
      %p156 = scmp.eq.s32.totalorder %s22, 0
      %p157 = por %p155, %p156
      %p158 = scmp.ne.s32.totalorder %s144, %s145
      %p159 = scmp.eq.s32.totalorder %s23, 3
      %p160 = por %p158, %p159
      %p162 = scmp.ne.s32.totalorder %s145, %s161
      %p163 = scmp.eq.s32.totalorder %s23, 0
      %p164 = por %p162, %p163
      %p165 = scmp.le.s32.totalorder 1, %s17
      %p166 = scmp.lt.s32.totalorder %s17, 5
      %p167 = pnand %p165, %p166
      %p168 = pneg %p167
      // Predicated region
      $region9: #{tpu_custom_call.1} parent=5 // pred_check
        _
      $region10: #{tpu_custom_call.1} parent=5 // pred_check_branch
        %170 = sbr.rel (%p167) target = $region12
      $region11: #{tpu_custom_call.1} parent=5 // pred_region
        %s171 = ssub.s32 %s17, 1
        // Predicated region
        $region13: #{tpu_custom_call.1} parent=11 // pred_check
          %p172 = pneg %p50
        $region14: #{tpu_custom_call.1} parent=11 // pred_check_branch
          %174 = sbr.rel (%p172) target = $region16
        $region15: #{tpu_custom_call.1} parent=11 // pred_region
          _
        $region16: #{tpu_custom_call.1} parent=11 // pred_fallthru
          _
        // Predicated region
        $region17: #{tpu_custom_call.1} parent=11 // pred_check
          %p175 = pneg %p71
        $region18: #{tpu_custom_call.1} parent=11 // pred_check_branch
          %177 = sbr.rel (%p175) target = $region20
        $region19: #{tpu_custom_call.1} parent=11 // pred_region
          _
        $region20: #{tpu_custom_call.1} parent=11 // pred_fallthru
          _
      $region12: #{tpu_custom_call.1} parent=5 // pred_fallthru
        _
      %p178 = scmp.lt.s32.totalorder %s17, 4
      // Predicated region
      $region21: #{tpu_custom_call.1} parent=5 // pred_check
        %p179 = pneg %p178
      $region22: #{tpu_custom_call.1} parent=5 // pred_check_branch
        %181 = sbr.rel (%p179) target = $region24
      $region23: #{tpu_custom_call.1} parent=5 // pred_region
        // Predicated region
        $region25: #{tpu_custom_call.1} parent=23 // pred_check
          %p182 = pneg %p99
        $region26: #{tpu_custom_call.1} parent=23 // pred_check_branch
          %184 = sbr.rel (%p182) target = $region28
        $region27: #{tpu_custom_call.1} parent=23 // pred_region
          %s185 = sand.u32 %s89, 1
          %s186 = scalar_lea.sflag [#allocation3], %s185
          %s187 = sand.u32 %s89, 1
          %s188 = smul.addr %s187, 8
          %s189 = scalar_lea.vmem [#allocation2], %s188
          %s190 = smul.u32 %s24, 2
          %s191 = sadd.s32 %s190, %s25
          %p192 = scmp.lt.s32.totalorder %s191, 2
          %s193 = scalar_select %p192, %s191, 2
          %195 = vsyncadd %s186, 0
          %s196 = smul.addr %s193, 8
          %s197 = scalar_lea.hbm %s2, %s196
          %s199 = sshll.u32 %s197, 4
          %s200 = int_to_ptr.hbm [resolvable:$true] %s199
          %s201 = sshll.u32 %s189, 4
          %s202 = int_to_ptr.vmem [resolvable:$true] %s201
          %204 = dma.hbm_to_vmem [thread:$0]  %s200, 128, %s202, %s186
        $region28: #{tpu_custom_call.1} parent=23 // pred_fallthru
          _
      $region24: #{tpu_custom_call.1} parent=5 // pred_fallthru
        _
      %p205 = scmp.le.s32.totalorder 1, %s17
      %p206 = scmp.lt.s32.totalorder %s17, 5
      %p207 = pnand %p205, %p206
      %p208 = pneg %p207
      // Predicated region
      $region29: #{tpu_custom_call.1} parent=5 // pred_check
        _
      $region30: #{tpu_custom_call.1} parent=5 // pred_check_branch
        %210 = sbr.rel (%p207) target = $region32
      $region31: #{tpu_custom_call.1} parent=5 // pred_region
        %s211 = ssub.s32 %s17, 1
        %s212 = sand.u32 %s92, 1
        %s213 = scalar_lea.sflag [#allocation3], %s212
        %s214 = sand.u32 %s92, 1
        %s215 = smul.addr %s214, 8
        %s216 = scalar_lea.vmem [#allocation2], %s215
        // Predicated region
        $region33: #{tpu_custom_call.1} parent=31 // pred_check
          %p217 = pneg %p105
        $region34: #{tpu_custom_call.1} parent=31 // pred_check_branch
          %219 = sbr.rel (%p217) target = $region36
        $region35: #{tpu_custom_call.1} parent=31 // pred_region
          %221 = dma.done %s213, 128
        $region36: #{tpu_custom_call.1} parent=31 // pred_fallthru
          _
        %p222 = pneg %p50
        %p223 = pneg %p47
        %p224 = pneg %p71
        %p225 = pneg %p68
        %s226 = sand.u32 %s92, 1
        %s227 = scalar_lea.sflag [#allocation3], %s226
        %s228 = sand.u32 %s92, 1
        %s229 = smul.addr %s228, 8
        %s230 = scalar_lea.vmem [#allocation2], %s229
        %p231 = pneg %p105
        %p232 = pneg %p102
        %p233 = pneg %p131
        %p234 = pneg %p128
        %p235 = scmp.lt.s32.totalorder %s26, 1
        %s236 = scalar_select %p235, %s26, 1
        %s237 = scalar_lea.vmem %s3, %s236
        %p238 = pneg %p157
        %p239 = pneg %p154
        %s240 = sand.u32 %s144, 1
        %s241 = scalar_lea.sflag [#allocation4], %s240
        %s242 = sand.u32 %s144, 1
        %s243 = smul.addr %s242, 8
        %s244 = scalar_lea.vmem [#allocation5], %s243
        %s245 = smul.u32 %s26, 2
        %s246 = sadd.s32 %s245, %s27
        %p247 = scmp.lt.s32.totalorder %s246, 2
        %s248 = scalar_select %p247, %s246, 2
        %p249 = scmp.lt.s32.totalorder %s26, 1
        %s250 = scalar_select %p249, %s26, 1
        %s251 = scalar_lea.vmem %s3, %s250
        %s252 = smul.u32 %s26, 2
        %s253 = sadd.s32 %s252, %s27
        %p254 = scmp.eq.s32.totalorder %s27, 0
        // Predicated region
        $region37: #{tpu_custom_call.1} parent=31 // pred_check
          %p255 = pneg %p254
        $region38: #{tpu_custom_call.1} parent=31 // pred_check_branch
          %257 = sbr.rel (%p255) target = $region40
        $region39: #{tpu_custom_call.1} parent=31 // pred_region
          %vm258 = vcmask 64512
          %259 = vst.msk [vmem:[%s244] sm:$0xff] %vm258, 0.0
          %vm260 = vcmask 0
          %261 = vst.msk [vmem:[%s251] sm:$0x1] %vm260, 0.0
        $region40: #{tpu_custom_call.1} parent=31 // pred_fallthru
          _
        %p262 = scmp.eq.s32.totalorder %s26, 0
        %p263 = pnand %p262, %p254
        %p264 = pneg %p263
        // Predicated region
        $region41: #{tpu_custom_call.1} parent=31 // pred_check
          _
        $region42: #{tpu_custom_call.1} parent=31 // pred_check_branch
          %266 = sbr.rel (%p263) target = $region44
        $region43: #{tpu_custom_call.1} parent=31 // pred_region
          %v267 = vld [vmem:[%s0] sm:$0xff]
          %v268 = vld [vmem:[%s1] sm:$0xff]
          %vm269 = vcmask 130048
          %v270 = vsel %vm269, %v267, -inf
          %271 = vmax.xlane.f32.xlu0 %v270
          %v272 = vpop.xlane.xlu0 %271
          %v273 = vsub.f32 %v267, %v272
          %v274 = vmul.f32 %v273, 1.442695
          %v275 = vpow.pop %v274
          %v276 = vsel %vm269, %v275, 0.0
          %277 = vadd.xlane.f32.xlu0 %v276
          %v278 = vpop.xlane.xlu0 %277
          %v279 = vlog2.pop %v278
          %v280 = vmul.f32 %v279, 0.6931472
          %v281 = vadd.f32 %v272, %v280
          %v282 = vlaneseq
          %v283 = vand.u32 %v282, 127
          %284 = vset.pattern.permute.xlu0 0
          %285 = vperm.xlu0 %284, %v268
          %v286 = vpop.permute.xlu0 %285
          %vm287 = vcmp.eq.s32.totalorder %v283, %v286
          %v288 = vsel %vm287, 1, 0
          %v289 = vcvt.s32.f32 %v288
          %v290 = vmul.f32 %v267, %v289
          %v291 = vsel %vm269, %v290, 0.0
          %292 = vadd.xlane.f32.xlu0 %v291
          %v293 = vpop.xlane.xlu0 %292
          %v294 = vsub.f32 %v281, %v293
          %vm295 = vcmask 7168
          %v296 = vsel %vm295, %v294, 0.0
          %297 = vadd.xlane.f32.xlu0 %v296
          %v298 = vpop.xlane.xlu0 %297
          %v299 = vrot.slane %v298, 4
          %v300 = vadd.f32 %v298, %v299
          %v301 = vrot.slane %v300, 2
          %v302 = vadd.f32 %v300, %v301
          %v303 = vrot.slane %v302, 1
          %v304 = vadd.f32 %v302, %v303
          %s305 = vtos %v304
          %v306 = vrcp.pop 8.0
          %v307 = vmul.f32 8.0, %v306
          %v308 = vsub.f32 1.0, %v307
          %v309 = vmul.f32 %v306, %v308
          %v310 = vadd.f32 %v306, %v309
          %vm311 = vweird.f32 %v306
          %v312 = vsel %vm311, %v306, %v310
          %s313 = vtos %v312
          %s314 = smul.f32 %s305, %s313
          %v315 = vstv %s314
          %vm316 = vcmask 0
          %317 = vst.msk [vmem:[%s251] sm:$0x1] %vm316, %v315
        $region44: #{tpu_custom_call.1} parent=31 // pred_fallthru
          _
        %p318 = scmp.lt.s32.totalorder %s253, 3
        // Predicated region
        $region45: #{tpu_custom_call.1} parent=31 // pred_check
          %p319 = pneg %p318
        $region46: #{tpu_custom_call.1} parent=31 // pred_check_branch
          %321 = sbr.rel (%p319) target = $region48
        $region47: #{tpu_custom_call.1} parent=31 // pred_region
          %v322 = vld [vmem:[%s216] sm:$0xff]
          %v323 = vlaneseq
          %v324 = vand.u32 %v323, 127
          %p325 = scmp.eq.s32.totalorder %s253, 2
          %s326 = scalar_select %p325, 44, 128
          %v327 = vstv %s326
          %vm328 = vcmp.lt.s32.totalorder %v324, %v327
          %v329 = vsel %vm328, %v322, 0.0
          %v330 = vld [vmem:[%s244] sm:$0xff]
          %331 = vmatpush.xpose.msra.mxu0 0.0
          %332 = vmatpush.xpose.msra.mxu0 0.0
          %333 = vmatpush.xpose.msra.mxu0 0.0
          %334 = vmatpush.xpose.msra.mxu0 0.0
          %335 = vmatpush.xpose.msra.mxu0 0.0
          %336 = vmatpush.xpose.msra.mxu0 0.0
          %337 = vmatpush.xpose.msra.mxu0 0.0
          %338 = vmatpush.xpose.msra.mxu0 0.0
          %339 = vmatpush.xpose.msra.mxu0 0.0
          %340 = vmatpush.xpose.msra.mxu0 0.0
          %341 = vmatpush.xpose.msra.mxu0 0.0
          %342 = vmatpush.xpose.msra.mxu0 0.0
          %343 = vmatpush.xpose.msra.mxu0 0.0
          %344 = vmatpush.xpose.msra.mxu0 0.0
          %345 = vmatpush.xpose.msra.mxu0 0.0
          %346 = vmatpush.xpose.msra.mxu0 %v329
          %347 = vmatmul.f32.gmra.mxu0 %v329
          %v348 = vpop.f32.mrf.mxu0
          %v349 = vadd.f32 0.0, %v348
          %350 = vdwg.mxu0
          %v351 = vadd.f32 %v330, %v349
          %vm352 = vcmask 64512
          %353 = vst.msk [vmem:[%s244] sm:$0xff] %vm352, %v351
        $region48: #{tpu_custom_call.1} parent=31 // pred_fallthru
          _
        %p354 = scmp.lt.s32.totalorder %s26, 1
        %s355 = scalar_select %p354, %s26, 1
        %s356 = scalar_lea.vmem %s3, %s355
        %s357 = sand.u32 %s144, 1
        %s358 = scalar_lea.sflag [#allocation4], %s357
        %s359 = sand.u32 %s144, 1
        %s360 = smul.addr %s359, 8
        %s361 = scalar_lea.vmem [#allocation5], %s360
        // Predicated region
        $region49: #{tpu_custom_call.1} parent=31 // pred_check
          %p362 = pneg %p128
        $region50: #{tpu_custom_call.1} parent=31 // pred_check_branch
          %364 = sbr.rel (%p362) target = $region52
        $region51: #{tpu_custom_call.1} parent=31 // pred_region
          _
        $region52: #{tpu_custom_call.1} parent=31 // pred_fallthru
          _
        // Predicated region
        $region53: #{tpu_custom_call.1} parent=31 // pred_check
          %p365 = pneg %p154
        $region54: #{tpu_custom_call.1} parent=31 // pred_check_branch
          %367 = sbr.rel (%p365) target = $region56
        $region55: #{tpu_custom_call.1} parent=31 // pred_region
          %369 = vsyncadd %s358, 0
          %s370 = smul.addr %s26, 8
          %s371 = scalar_lea.hbm %s4, %s370
          %s373 = sshll.u32 %s361, 4
          %s374 = int_to_ptr.vmem [resolvable:$true] %s373
          %s375 = sshll.u32 %s371, 4
          %s376 = int_to_ptr.hbm [resolvable:$true] %s375
          %378 = dma.vmem_to_hbm [thread:$0]  %s374, 128, %s376, %s358
        $region56: #{tpu_custom_call.1} parent=31 // pred_fallthru
          _
      $region32: #{tpu_custom_call.1} parent=5 // pred_fallthru
        _
      %p379 = scmp.le.s32.totalorder 2, %s17
      // Predicated region
      $region57: #{tpu_custom_call.1} parent=5 // pred_check
        %p380 = pneg %p379
      $region58: #{tpu_custom_call.1} parent=5 // pred_check_branch
        %382 = sbr.rel (%p380) target = $region60
      $region59: #{tpu_custom_call.1} parent=5 // pred_region
        %s383 = ssub.s32 %s17, 2
        // Predicated region
        $region61: #{tpu_custom_call.1} parent=59 // pred_check
          %p384 = pneg %p134
        $region62: #{tpu_custom_call.1} parent=59 // pred_check_branch
          %386 = sbr.rel (%p384) target = $region64
        $region63: #{tpu_custom_call.1} parent=59 // pred_region
          %p387 = scmp.lt.s32.totalorder %s28, 1
          %s388 = scalar_select %p387, %s28, 1
          %s389 = scalar_lea.vmem %s3, %s388
        $region64: #{tpu_custom_call.1} parent=59 // pred_fallthru
          _
        // Predicated region
        $region65: #{tpu_custom_call.1} parent=59 // pred_check
          %p390 = pneg %p160
        $region66: #{tpu_custom_call.1} parent=59 // pred_check_branch
          %392 = sbr.rel (%p390) target = $region68
        $region67: #{tpu_custom_call.1} parent=59 // pred_region
          %s393 = sand.u32 %s145, 1
          %s394 = scalar_lea.sflag [#allocation4], %s393
          %s395 = sand.u32 %s145, 1
          %s396 = smul.addr %s395, 8
          %s397 = scalar_lea.vmem [#allocation5], %s396
          %399 = dma.done %s394, 128
        $region68: #{tpu_custom_call.1} parent=59 // pred_fallthru
          _
      $region60: #{tpu_custom_call.1} parent=5 // pred_fallthru
        _
    $region6: #{tpu_custom_call.1} parent=1 // loop_footer
      %s21 = sadd.s32 1, %s17
    $region7: #{tpu_custom_call.1} parent=1 // loop_footer_branch
      %16 = sbr.rel target = $region3
    $region8: #{tpu_custom_call.1} parent=1 // loop_exit
      _
    %400 = vsyncpa [#allocation3], 1
    %s401 = scalar_lea.sflag [#allocation3], 1
    %402 = vsyncpa %s401, 1
    %403 = vsyncpa [#allocation4], 1
    %s404 = scalar_lea.sflag [#allocation4], 1
    %405 = vsyncpa %s404, 1

</llo_original>
